<compile_context>
chip_gen: v6e
topology: v6e:2x2x1
jax: 0.10.0
libtpu: 0.0.40
codegen_flags: <defaults>
</compile_context>

<pallas_src>
import jax
import jax.numpy as jnp
from jax import lax
from jax.experimental import pallas as pl
from jax.experimental.pallas import tpu as pltpu


# ---------------------------------------------------------------------------
# Shared in-kernel math: whole batch, lane-dense scores/weights.
# ---------------------------------------------------------------------------
def _attention_core(q, enc, enc_proj, wa_t, va_row, ctx_ref, w_ref):
    # q:        (B, H)    decoder hidden states (whole batch)
    # enc:      (B, S, H) encoder outputs
    # enc_proj: (B, S, H) Ua(encoder_outputs), f32
    # wa_t:     (H, H)    Wa weight pre-transposed to (in, out)
    # va_row:   (1, H)    Va weight in its native nn.Linear row layout
    B, S, H = enc.shape

    # Batched Wa(q): ONE (B,H)@(H,H) MXU matmul for the whole batch.
    q_proj = jnp.dot(q, wa_t, preferred_element_type=jnp.float32)          # (B, H)
    q_b = lax.broadcast_in_dim(q_proj, (B, S, H), (0, 2))                  # (B, S, H)

    # energy = tanh(Wa(q) + Ua(enc)); tanh runs on the EUP.
    energy = jnp.tanh(q_b + enc_proj)                                      # (B, S, H)

    # Va(energy) with S kept on the lane axis -> lane-dense scores/weights.
    va_b = lax.broadcast_in_dim(va_row, (B, S, H), (1, 2))
    scores = jnp.sum(energy * va_b, axis=-1)                               # (B, S)

    # Numerically stable softmax over S (lane axis). Exact divide: the
    # denominator is a single scalar per row, approx reciprocal buys nothing.
    m = jnp.max(scores, axis=-1, keepdims=True)
    e = jnp.exp(scores - m)
    denom = jnp.sum(e, axis=-1, keepdims=True)
    weights = e / denom                                                    # (B, S)

    # context = weights @ enc per batch element: batched (1,S)@(S,H) MXU matmul
    # (contraction on the last lhs dim -> no implicit transpose).
    w3 = lax.broadcast_in_dim(weights, (B, 1, S), (0, 2))                  # (B, 1, S)
    ctx = jnp.einsum("bqs,bsh->bqh", w3.astype(enc.dtype), enc,
                     preferred_element_type=jnp.float32)                   # (B, 1, H)

    ctx_ref[...] = ctx.astype(ctx_ref.dtype)
    w_ref[...] = weights.astype(w_ref.dtype)


# ---------------------------------------------------------------------------
# Kernel 1: fully fused single-step forward (Ua(enc) computed in-kernel,
#           no enc_proj HBM round trip).
# ---------------------------------------------------------------------------
def _fused_attention_kernel(q_ref, enc_ref, wa_t_ref, ua_t_ref, va_ref,
                            ctx_ref, w_ref):
    B, S, H = enc_ref.shape
    enc = enc_ref[...]
    # Row-tiled Ua(enc) GEMM: (B*S, H) @ (H, H). With S a multiple of 8 the
    # reshape is layout-preserving (pure sublane-tile view).
    enc_flat = enc.reshape(B * S, H)
    enc_proj = jnp.dot(enc_flat, ua_t_ref[...],
                       preferred_element_type=jnp.float32).reshape(B, S, H)
    _attention_core(q_ref[...], enc, enc_proj, wa_t_ref[...], va_ref[...],
                    ctx_ref, w_ref)


# ---------------------------------------------------------------------------
# Kernel 2: Ua projection as a row-tiled GEMM (call once per encoder sequence
#           in a decode loop).
# ---------------------------------------------------------------------------
def _ua_projection_kernel(encf_ref, ua_t_ref, out_ref):
    out_ref[...] = jnp.dot(encf_ref[...], ua_t_ref[...],
                           preferred_element_type=jnp.float32).astype(out_ref.dtype)


def precompute_ua_projection(encoder_outputs, ua_t, *, row_tile=512):
    """enc_proj = Ua(encoder_outputs), as a (B*S, H) row-tiled GEMM."""
    B, S, H = encoder_outputs.shape
    rows = B * S
    enc_flat = encoder_outputs.reshape(rows, H)        # wrapper-side, free
    tile_m = rows if rows <= row_tile else row_tile    # fat MXU row blocks
    out = pl.pallas_call(
        _ua_projection_kernel,
        out_shape=jax.ShapeDtypeStruct((rows, H), jnp.float32),
        grid=(pl.cdiv(rows, tile_m),),
        in_specs=[
            pl.BlockSpec((tile_m, H), lambda i: (i, 0)),
            pl.BlockSpec((H, H), lambda i: (0, 0)),
        ],
        out_specs=pl.BlockSpec((tile_m, H), lambda i: (i, 0)),
        compiler_params=pltpu.CompilerParams(dimension_semantics=("parallel",)),
    )(enc_flat, ua_t)
    return out.reshape(B, S, H)


# ---------------------------------------------------------------------------
# Kernel 3: per-decoder-step attention using a precomputed Ua projection
#           (for multi-step decode loops).
# ---------------------------------------------------------------------------
def _attention_step_kernel(q_ref, enc_ref, encp_ref, wa_t_ref, va_ref,
                           ctx_ref, w_ref):
    _attention_core(q_ref[...], enc_ref[...], encp_ref[...],
                    wa_t_ref[...], va_ref[...], ctx_ref, w_ref)


def attention_step(decoder_hidden_query, encoder_outputs, enc_proj, wa_t, va_row):
    B, S, H = encoder_outputs.shape
    ctx, w = pl.pallas_call(
        _attention_step_kernel,
        out_shape=(
            jax.ShapeDtypeStruct((B, 1, H), jnp.float32),   # context
            jax.ShapeDtypeStruct((B, S), jnp.float32),      # weights, lane-dense
        ),
        grid=(1,),
        in_specs=[
            pl.BlockSpec((B, H), lambda i: (0, 0)),
            pl.BlockSpec((B, S, H), lambda i: (0, 0, 0)),
            pl.BlockSpec((B, S, H), lambda i: (0, 0, 0)),
            pl.BlockSpec((H, H), lambda i: (0, 0)),
            pl.BlockSpec((1, H), lambda i: (0, 0)),
        ],
        out_specs=(
            pl.BlockSpec((B, 1, H), lambda i: (0, 0, 0)),
            pl.BlockSpec((B, S), lambda i: (0, 0)),
        ),
        compiler_params=pltpu.CompilerParams(dimension_semantics=("arbitrary",)),
    )(decoder_hidden_query, encoder_outputs, enc_proj, wa_t, va_row)
    return ctx.reshape(B, H), w


# ---------------------------------------------------------------------------
# Wrappers
# ---------------------------------------------------------------------------
def prepare_attention_params(wa, ua, va):
    """One-time weight layout prep: (out,in) -> (in,out). Hoisted out of the
    decode loop so the transposes are not re-executed every timestep."""
    return wa.T, ua.T, va   # va stays (1, H): consumed row-wise (lane-dense)


def attention_forward_prepared(decoder_hidden_query, encoder_outputs,
                               wa_t, ua_t, va_row):
    B, S, H = encoder_outputs.shape
    ctx, w = pl.pallas_call(
        _fused_attention_kernel,
        out_shape=(
            jax.ShapeDtypeStruct((B, 1, H), jnp.float32),
            jax.ShapeDtypeStruct((B, S), jnp.float32),
        ),
        grid=(1,),  # whole batch in one invocation; see v7x note in header
        in_specs=[
            pl.BlockSpec((B, H), lambda i: (0, 0)),
            pl.BlockSpec((B, S, H), lambda i: (0, 0, 0)),
            pl.BlockSpec((H, H), lambda i: (0, 0)),
            pl.BlockSpec((H, H), lambda i: (0, 0)),
            pl.BlockSpec((1, H), lambda i: (0, 0)),
        ],
        out_specs=(
            pl.BlockSpec((B, 1, H), lambda i: (0, 0, 0)),
            pl.BlockSpec((B, S), lambda i: (0, 0)),
        ),
        compiler_params=pltpu.CompilerParams(dimension_semantics=("arbitrary",)),
    )(decoder_hidden_query, encoder_outputs, wa_t, ua_t, va_row)
    return ctx.reshape(B, H), w


def attention_forward(decoder_hidden_query, encoder_outputs, wa, ua, va):
    """Full module forward (matches the PyTorch Attention.forward).

    Single-step path: one fused kernel. For a decode loop, call
    prepare_attention_params + precompute_ua_projection once, then
    attention_step per timestep.
    """
    wa_t, ua_t, va_row = prepare_attention_params(wa, ua, va)
    return attention_forward_prepared(decoder_hidden_query, encoder_outputs,
                                      wa_t, ua_t, va_row)


# ---------------------------------------------------------------------------
# Pure-JAX reference of the PyTorch forward, for a correctness check.
# ---------------------------------------------------------------------------
def reference_forward(decoder_hidden_query, encoder_outputs, wa, ua, va):
    q_proj = decoder_hidden_query @ wa.T                          # (B, H)
    enc_proj = jnp.einsum("bsh,oh->bso", encoder_outputs, ua)     # (B, S, H)
    energy = jnp.tanh(q_proj[:, None, :] + enc_proj)
    scores = jnp.einsum("bsh,oh->bso", energy, va)[..., 0]        # (B, S)
    weights = jax.nn.softmax(scores, axis=1)
    context = jnp.einsum("bs,bsh->bh", weights, encoder_outputs)
    return context, weights


if __name__ == "__main__":
    B, S, H = 2, 8, 32  # batch, music_seq_len, hidden_dim

    key = jax.random.PRNGKey(0)
    k_q, k_enc, k_wa, k_ua, k_va = jax.random.split(key, 5)

    decoder_hidden_query = jax.random.normal(k_q, (B, H), dtype=jnp.float32)
    encoder_outputs = jax.random.normal(k_enc, (B, S, H), dtype=jnp.float32)

    # PyTorch nn.Linear-style uniform(-1/sqrt(in), 1/sqrt(in)) init, bias=False.
    bound = 1.0 / jnp.sqrt(jnp.float32(H))
    wa = jax.random.uniform(k_wa, (H, H), jnp.float32, -bound, bound)  # Wa.weight
    ua = jax.random.uniform(k_ua, (H, H), jnp.float32, -bound, bound)  # Ua.weight
    va = jax.random.uniform(k_va, (1, H), jnp.float32, -bound, bound)  # Va.weight

    # Path 1: single fused kernel (module forward).
    ctx, attn_w = attention_forward(decoder_hidden_query, encoder_outputs, wa, ua, va)
    jax.block_until_ready((ctx, attn_w))

    # Path 2: decode-loop split (Ua projection precomputed once, step reused).
    wa_t, ua_t, va_row = prepare_attention_params(wa, ua, va)
    enc_proj = precompute_ua_projection(encoder_outputs, ua_t)
    ctx2, attn_w2 = attention_step(decoder_hidden_query, encoder_outputs,
                                   enc_proj, wa_t, va_row)
    jax.block_until_ready((ctx2, attn_w2))

    ctx_ref, attn_w_ref = reference_forward(
        decoder_hidden_query, encoder_outputs, wa, ua, va)

    assert ctx.shape == (B, H) and attn_w.shape == (B, S)
    assert jnp.allclose(ctx, ctx_ref, atol=1e-4, rtol=1e-4)
    assert jnp.allclose(attn_w, attn_w_ref, atol=1e-4, rtol=1e-4)
    assert jnp.allclose(ctx2, ctx_ref, atol=1e-4, rtol=1e-4)
    assert jnp.allclose(attn_w2, attn_w_ref, atol=1e-4, rtol=1e-4)

    # TODO(synk): for large S*H, add an S-tiled online-softmax variant (trailing
    # "arbitrary" grid axis + m/l/acc scratch) and bf16 enc/enc_proj storage.
    print("KERNEL_OK")
</pallas_src>

<mosaic_0001>
module attributes {stable_mosaic.version = 11 : i64} {
  func.func @_fused_attention_kernel(%arg0: i32, %arg1: memref<2x32xf32, #tpu.memory_space<vmem>>, %arg2: memref<2x8x32xf32, #tpu.memory_space<vmem>>, %arg3: memref<32x32xf32, #tpu.memory_space<vmem>>, %arg4: memref<32x32xf32, #tpu.memory_space<vmem>>, %arg5: memref<1x32xf32, #tpu.memory_space<vmem>>, %arg6: memref<2x1x32xf32, #tpu.memory_space<vmem>>, %arg7: memref<2x8xf32, #tpu.memory_space<vmem>>) attributes {dimension_semantics = [#tpu.dimension_semantics<arbitrary>], iteration_bounds = array<i64: 1>, scalar_prefetch = 0 : i64, scratch_operands = 0 : i64, tpu.core_type = #tpu.core_type<tc>, window_params = [{pipeline_mode = #tpu.pipeline_mode<synchronous>, transform_indices = @transform_0, window_bounds = array<i64: 2, 32>}, {pipeline_mode = #tpu.pipeline_mode<synchronous>, transform_indices = @transform_1, window_bounds = array<i64: 2, 8, 32>}, {pipeline_mode = #tpu.pipeline_mode<synchronous>, transform_indices = @transform_2, window_bounds = array<i64: 32, 32>}, {pipeline_mode = #tpu.pipeline_mode<synchronous>, transform_indices = @transform_3, window_bounds = array<i64: 32, 32>}, {pipeline_mode = #tpu.pipeline_mode<synchronous>, transform_indices = @transform_4, window_bounds = array<i64: 1, 32>}, {pipeline_mode = #tpu.pipeline_mode<synchronous>, transform_indices = @transform_5, window_bounds = array<i64: 2, 1, 32>}, {pipeline_mode = #tpu.pipeline_mode<synchronous>, transform_indices = @transform_6, window_bounds = array<i64: 2, 8>}]} {
    %c0 = arith.constant 0 : index
    %c0_0 = arith.constant 0 : index
    %c0_1 = arith.constant 0 : index
    %0 = vector.load %arg2[%c0, %c0_0, %c0_1] : memref<2x8x32xf32, #tpu.memory_space<vmem>>, vector<2x8x32xf32>
    %1 = vector.shape_cast %0 : vector<2x8x32xf32> to vector<16x32xf32>
    %c0_2 = arith.constant 0 : index
    %c0_3 = arith.constant 0 : index
    %2 = vector.load %arg4[%c0_2, %c0_3] : memref<32x32xf32, #tpu.memory_space<vmem>>, vector<32x32xf32>
    %cst = arith.constant dense<0.000000e+00> : vector<16x32xf32>
    %3 = tpu.matmul %1, %2, %cst {dimension_numbers = #tpu.dot_dimension_numbers<[1], [0], [0], [1], [0, 0, 1, 1], [], []>} : vector<16x32xf32>, vector<32x32xf32>, vector<16x32xf32> -> vector<16x32xf32>
    %4 = vector.shape_cast %3 : vector<16x32xf32> to vector<2x8x32xf32>
    %c0_4 = arith.constant 0 : index
    %c0_5 = arith.constant 0 : index
    %5 = vector.load %arg1[%c0_4, %c0_5] : memref<2x32xf32, #tpu.memory_space<vmem>>, vector<2x32xf32>
    %c0_6 = arith.constant 0 : index
    %c0_7 = arith.constant 0 : index
    %6 = vector.load %arg3[%c0_6, %c0_7] : memref<32x32xf32, #tpu.memory_space<vmem>>, vector<32x32xf32>
    %c0_8 = arith.constant 0 : index
    %c0_9 = arith.constant 0 : index
    %7 = vector.load %arg5[%c0_8, %c0_9] : memref<1x32xf32, #tpu.memory_space<vmem>>, vector<1x32xf32>
    %cst_10 = arith.constant dense<0.000000e+00> : vector<2x32xf32>
    %8 = tpu.matmul %5, %6, %cst_10 {dimension_numbers = #tpu.dot_dimension_numbers<[1], [0], [0], [1], [0, 0, 1, 1], [], []>} : vector<2x32xf32>, vector<32x32xf32>, vector<2x32xf32> -> vector<2x32xf32>
    %9 = vector.shape_cast %8 : vector<2x32xf32> to vector<2x1x32xf32>
    %10 = vector.broadcast %9 : vector<2x1x32xf32> to vector<2x8x32xf32>
    %11 = arith.addf %10, %4 : vector<2x8x32xf32>
    %12 = math.tanh %11 : vector<2x8x32xf32>
    %13 = vector.shape_cast %7 : vector<1x32xf32> to vector<1x1x32xf32>
    %14 = vector.broadcast %13 : vector<1x1x32xf32> to vector<2x8x32xf32>
    %15 = arith.mulf %12, %14 : vector<2x8x32xf32>
    %cst_11 = arith.constant dense<0.000000e+00> : vector<2x8xf32>
    %16 = vector.multi_reduction <add>, %15, %cst_11 [2] : vector<2x8x32xf32> to vector<2x8xf32>
    %cst_12 = arith.constant dense<0xFF800000> : vector<2xf32>
    %17 = vector.multi_reduction <maximumf>, %16, %cst_12 [1] : vector<2x8xf32> to vector<2xf32>
    %18 = vector.shape_cast %17 : vector<2xf32> to vector<2x1xf32>
    %19 = vector.broadcast %18 : vector<2x1xf32> to vector<2x8xf32>
    %20 = arith.subf %16, %19 : vector<2x8xf32>
    %21 = math.exp %20 : vector<2x8xf32>
    %cst_13 = arith.constant dense<0.000000e+00> : vector<2xf32>
    %22 = vector.multi_reduction <add>, %21, %cst_13 [1] : vector<2x8xf32> to vector<2xf32>
    %23 = vector.shape_cast %22 : vector<2xf32> to vector<2x1xf32>
    %24 = vector.broadcast %23 : vector<2x1xf32> to vector<2x8xf32>
    %25 = arith.divf %21, %24 : vector<2x8xf32>
    %26 = vector.shape_cast %25 : vector<2x8xf32> to vector<2x1x8xf32>
    "tpu.trace_start"() <{level = 10 : i32, message = "bqs,bsh->bqh"}> : () -> ()
    %cst_14 = arith.constant dense<0.000000e+00> : vector<2x1x32xf32>
    %27 = tpu.matmul %26, %0, %cst_14 {dimension_numbers = #tpu.dot_dimension_numbers<[2], [1], [1], [2], [0, 0, 0, 1, 1, 2], [0], [0]>} : vector<2x1x8xf32>, vector<2x8x32xf32>, vector<2x1x32xf32> -> vector<2x1x32xf32>
    "tpu.trace_stop"() : () -> ()
    %c0_15 = arith.constant 0 : index
    %c0_16 = arith.constant 0 : index
    %c0_17 = arith.constant 0 : index
    %28 = vector.load %arg6[%c0_15, %c0_16, %c0_17] : memref<2x1x32xf32, #tpu.memory_space<vmem>>, vector<2x1x32xf32>
    tpu.vector_store %arg6[%c0_15, %c0_16, %c0_17], %27 {strides = array<i32>} : memref<2x1x32xf32, #tpu.memory_space<vmem>>, vector<2x1x32xf32>,
    %c0_18 = arith.constant 0 : index
    %c0_19 = arith.constant 0 : index
    %29 = vector.load %arg7[%c0_18, %c0_19] : memref<2x8xf32, #tpu.memory_space<vmem>>, vector<2x8xf32>
    tpu.vector_store %arg7[%c0_18, %c0_19], %25 {strides = array<i32>} : memref<2x8xf32, #tpu.memory_space<vmem>>, vector<2x8xf32>,
    return
  }
  func.func @transform_0(%arg0: i32) -> (i32, i32) {
    %c0_i32 = arith.constant 0 : i32
    %c0_i32_0 = arith.constant 0 : i32
    %c0_i32_1 = arith.constant 0 : i32
    return %c0_i32, %c0_i32_0 : i32, i32
  }
  func.func @transform_1(%arg0: i32) -> (i32, i32, i32) {
    %c0_i32 = arith.constant 0 : i32
    %c0_i32_0 = arith.constant 0 : i32
    %c0_i32_1 = arith.constant 0 : i32
    %c0_i32_2 = arith.constant 0 : i32
    return %c0_i32, %c0_i32_0, %c0_i32_1 : i32, i32, i32
  }
  func.func @transform_2(%arg0: i32) -> (i32, i32) {
    %c0_i32 = arith.constant 0 : i32
    %c0_i32_0 = arith.constant 0 : i32
    %c0_i32_1 = arith.constant 0 : i32
    return %c0_i32, %c0_i32_0 : i32, i32
  }
  func.func @transform_3(%arg0: i32) -> (i32, i32) {
    %c0_i32 = arith.constant 0 : i32
    %c0_i32_0 = arith.constant 0 : i32
    %c0_i32_1 = arith.constant 0 : i32
    return %c0_i32, %c0_i32_0 : i32, i32
  }
  func.func @transform_4(%arg0: i32) -> (i32, i32) {
    %c0_i32 = arith.constant 0 : i32
    %c0_i32_0 = arith.constant 0 : i32
    %c0_i32_1 = arith.constant 0 : i32
    return %c0_i32, %c0_i32_0 : i32, i32
  }
  func.func @transform_5(%arg0: i32) -> (i32, i32, i32) {
    %c0_i32 = arith.constant 0 : i32
    %c0_i32_0 = arith.constant 0 : i32
    %c0_i32_1 = arith.constant 0 : i32
    %c0_i32_2 = arith.constant 0 : i32
    return %c0_i32, %c0_i32_0, %c0_i32_1 : i32, i32, i32
  }
  func.func @transform_6(%arg0: i32) -> (i32, i32) {
    %c0_i32 = arith.constant 0 : i32
    %c0_i32_0 = arith.constant 0 : i32
    %c0_i32_1 = arith.constant 0 : i32
    return %c0_i32, %c0_i32_0 : i32, i32
  }
}

</mosaic_0001>

<llo_original>
// kernel: tpu_custom_call.1
$region0: #{tpu_custom_call.1}
  #allocation0 [shape = 'u32[]', space=smem, size = 0x4, offset = 0x4, fixed_abs, tag = 'smem constant byte address 0x4 - core index']
  #allocation1 [shape = 'u32[144,128]{1,0:T(1,128)}', space=vmem, size = 0x12000, scoped, tag = 'internal scratch']
  %s0 = inlined_call_operand.hbm [shape: f32[2,32], index: 0, kind: input, shape index: {}]
  %s1 = inlined_call_operand.hbm [shape: f32[2,8,32], index: 1, kind: input, shape index: {}]
  %s2 = inlined_call_operand.hbm [shape: f32[32,32], index: 2, kind: input, shape index: {}]
  %s3 = inlined_call_operand.hbm [shape: f32[32,32], index: 3, kind: input, shape index: {}]
  %s4 = inlined_call_operand.vmem [shape: f32[1,32], index: 4, kind: input, shape index: {}]
  %s5 = inlined_call_operand.hbm [shape: f32[2,1,32], index: 5, kind: output, shape index: {0}]
  %s6 = inlined_call_operand.hbm [shape: f32[2,8], index: 6, kind: output, shape index: {1}]
  %7 = xla_tuple %s5, %s6
  %s8 = sld [smem:[#allocation0]]
  $region54: #{tpu_custom_call.1} parent=0
    _
  %s10 = ssub.s32 1, %s8
  %s11 = scalar_select 0, %s10, %s8
  $region1: #{tpu_custom_call.1} parent=0
    #allocation2 [shape = 'u8[1024]{0}', space=vmem, size = 0x400, scoped, tag = 'input window, operand 0, single buffered']
    #allocation3 [shape = 's32[1]{0}', space=sflag, size = 0x4, scoped, tag = 'scoped memory for tpu_custom_call.1']
    #allocation4 [shape = 's32[1]{0}', space=sflag, size = 0x4, scoped, tag = 'scoped memory for tpu_custom_call.1']
    #allocation5 [shape = 'u8[8192]{0}', space=vmem, size = 0x2000, scoped, tag = 'input window, operand 1, single buffered']
    #allocation6 [shape = 's32[1]{0}', space=sflag, size = 0x4, scoped, tag = 'scoped memory for tpu_custom_call.1']
    #allocation7 [shape = 'u8[16384]{0}', space=vmem, size = 0x4000, scoped, tag = 'input window, operand 2, single buffered']
    #allocation8 [shape = 'u8[16384]{0}', space=vmem, size = 0x4000, scoped, tag = 'input window, operand 3, single buffered']
    #allocation9 [shape = 's32[1]{0}', space=sflag, size = 0x4, scoped, tag = 'scoped memory for tpu_custom_call.1']
    #allocation10 [shape = 'u8[1024]{0}', space=vmem, size = 0x400, scoped, tag = 'output window, operand 0, single buffered']
    #allocation11 [shape = 'u8[1024]{0}', space=vmem, size = 0x400, scoped, tag = 'output window, operand 1, single buffered']
    #allocation12 [shape = 's32[1]{0}', space=sflag, size = 0x4, scoped, tag = 'scoped memory for tpu_custom_call.1']
    %12 = vsyncpa [#allocation3], 0
    %13 = vsyncpa [#allocation6], 0
    %14 = vsyncpa [#allocation9], 0
    %15 = vsyncpa [#allocation4], 0
    %16 = vsyncpa [#allocation12], 0
    // Predicated region
    $region2: #{tpu_custom_call.1} parent=1 // pred_check
      _
    $region3: #{tpu_custom_call.1} parent=1 // pred_check_branch
      %18 = sbr.rel (0) target = $region5
    $region4: #{tpu_custom_call.1} parent=1 // pred_region
      %s20 = ssub.s32 32, 32
      %21 = vsyncadd [#allocation3], %s20
      %s23 = sshll.u32 [#allocation2], 4
      %s24 = int_to_ptr.vmem [resolvable:$true] %s23
      %26 = dma.hbm_to_vmem [thread:$0]  %s0, 32, %s24, [#allocation3]
    $region5: #{tpu_custom_call.1} parent=1 // pred_fallthru
      _
    // Predicated region
    $region6: #{tpu_custom_call.1} parent=1 // pred_check
      _
    $region7: #{tpu_custom_call.1} parent=1 // pred_check_branch
      %28 = sbr.rel (0) target = $region9
    $region8: #{tpu_custom_call.1} parent=1 // pred_region
      %s30 = ssub.s32 256, 256
      %31 = vsyncadd [#allocation6], %s30
      %s32 = sshll.u32 [#allocation5], 4
      %s33 = int_to_ptr.vmem [resolvable:$true] %s32
      %38 = dma.hbm_to_vmem [thread:$0]  %s1, 256, %s33, [#allocation6], 128, 128, 8
    $region9: #{tpu_custom_call.1} parent=1 // pred_fallthru
      _
    // Predicated region
    $region10: #{tpu_custom_call.1} parent=1 // pred_check
      _
    $region11: #{tpu_custom_call.1} parent=1 // pred_check_branch
      %40 = sbr.rel (0) target = $region13
    $region12: #{tpu_custom_call.1} parent=1 // pred_region
      %s42 = ssub.s32 512, 512
      %43 = vsyncadd [#allocation6], %s42
      %s44 = sshll.u32 [#allocation7], 4
      %s45 = int_to_ptr.vmem [resolvable:$true] %s44
      %50 = dma.hbm_to_vmem [thread:$0]  %s2, 512, %s45, [#allocation6], 128, 128, 8
    $region13: #{tpu_custom_call.1} parent=1 // pred_fallthru
      _
    // Predicated region
    $region14: #{tpu_custom_call.1} parent=1 // pred_check
      _
    $region15: #{tpu_custom_call.1} parent=1 // pred_check_branch
      %52 = sbr.rel (0) target = $region17
    $region16: #{tpu_custom_call.1} parent=1 // pred_region
      %s54 = ssub.s32 512, 512
      %55 = vsyncadd [#allocation9], %s54
      %s56 = sshll.u32 [#allocation8], 4
      %s57 = int_to_ptr.vmem [resolvable:$true] %s56
      %62 = dma.hbm_to_vmem [thread:$0]  %s3, 512, %s57, [#allocation9], 128, 128, 8
    $region17: #{tpu_custom_call.1} parent=1 // pred_fallthru
      _
    // Predicated region
    $region18: #{tpu_custom_call.1} parent=1 // pred_check
      _
    $region19: #{tpu_custom_call.1} parent=1 // pred_check_branch
      %64 = sbr.rel (0) target = $region21
    $region20: #{tpu_custom_call.1} parent=1 // pred_region
      _
    $region21: #{tpu_custom_call.1} parent=1 // pred_fallthru
      _
    // Predicated region
    $region22: #{tpu_custom_call.1} parent=1 // pred_check
      _
    $region23: #{tpu_custom_call.1} parent=1 // pred_check_branch
      %66 = sbr.rel (0) target = $region25
    $region24: #{tpu_custom_call.1} parent=1 // pred_region
      %67 = dma.done [#allocation3], 32
    $region25: #{tpu_custom_call.1} parent=1 // pred_fallthru
      _
    // Predicated region
    $region26: #{tpu_custom_call.1} parent=1 // pred_check
      _
    $region27: #{tpu_custom_call.1} parent=1 // pred_check_branch
      %69 = sbr.rel (0) target = $region29
    $region28: #{tpu_custom_call.1} parent=1 // pred_region
      %70 = dma.done [#allocation6], 256
    $region29: #{tpu_custom_call.1} parent=1 // pred_fallthru
      _
    // Predicated region
    $region30: #{tpu_custom_call.1} parent=1 // pred_check
      _
    $region31: #{tpu_custom_call.1} parent=1 // pred_check_branch
      %72 = sbr.rel (0) target = $region33
    $region32: #{tpu_custom_call.1} parent=1 // pred_region
      %73 = dma.done [#allocation6], 512
    $region33: #{tpu_custom_call.1} parent=1 // pred_fallthru
      _
    // Predicated region
    $region34: #{tpu_custom_call.1} parent=1 // pred_check
      _
    $region35: #{tpu_custom_call.1} parent=1 // pred_check_branch
      %75 = sbr.rel (0) target = $region37
    $region36: #{tpu_custom_call.1} parent=1 // pred_region
      %76 = dma.done [#allocation9], 512
    $region37: #{tpu_custom_call.1} parent=1 // pred_fallthru
      _
    %v77 = vld [vmem:[#allocation5] sm:$0xff]
    %v78 = vld [vmem:[#allocation5 + $0x8] sm:$0xff]
    %v79 = vld [vmem:[#allocation8] sm:$0xff]
    %v80 = vld [vmem:[#allocation8 + $0x8] sm:$0xff]
    %v81 = vld [vmem:[#allocation8 + $0x10] sm:$0xff]
    %v82 = vld [vmem:[#allocation8 + $0x18] sm:$0xff]
    %vm83 = vcmask 261120
    %v85 = vsel %vm83, %v77, 0
    %v88 = vsel %vm83, %v78, 0
    %90 = vmatprep.subr.mxu0 0.0
    %91 = vmatpush1.msra.mxu0 0.0
    %92 = vmatprep.subr.mxu0 0.0
    %93 = vmatpush1.msra.mxu0 0.0
    %94 = vmatprep.subr.mxu0 0.0
    %95 = vmatpush1.msra.mxu0 0.0
    %96 = vmatprep.subr.mxu0 0.0
    %97 = vmatpush1.msra.mxu0 0.0
    %98 = vmatprep.subr.mxu0 0.0
    %99 = vmatpush1.msra.mxu0 0.0
    %100 = vmatprep.subr.mxu0 0.0
    %101 = vmatpush1.msra.mxu0 0.0
    %102 = vmatprep.subr.mxu0 0.0
    %103 = vmatpush1.msra.mxu0 0.0
    %104 = vmatprep.subr.mxu0 0.0
    %105 = vmatpush1.msra.mxu0 0.0
    %106 = vmatprep.subr.mxu0 0.0
    %107 = vmatpush1.msra.mxu0 0.0
    %108 = vmatprep.subr.mxu0 0.0
    %109 = vmatpush1.msra.mxu0 0.0
    %110 = vmatprep.subr.mxu0 0.0
    %111 = vmatpush1.msra.mxu0 0.0
    %112 = vmatprep.subr.mxu0 0.0
    %113 = vmatpush1.msra.mxu0 0.0
    %114 = vmatprep.subr.mxu0 0.0
    %115 = vmatpush1.msra.mxu0 %v82
    %116 = vmatprep.subr.mxu0 0.0
    %117 = vmatpush1.msra.mxu0 %v81
    %118 = vmatprep.subr.mxu0 0.0
    %119 = vmatpush1.msra.mxu0 %v80
    %120 = vmatprep.subr.mxu0 0.0
    %121 = vmatpush1.msra.mxu0 %v79
    %122 = vmatprep.subr.mxu0 0.0
    %123 = vmatpush2.msra.mxu0 0.0
    %124 = vmatprep.subr.mxu0 0.0
    %125 = vmatpush2.msra.mxu0 0.0
    %126 = vmatprep.subr.mxu0 0.0
    %127 = vmatpush2.msra.mxu0 0.0
    %128 = vmatprep.subr.mxu0 0.0
    %129 = vmatpush2.msra.mxu0 0.0
    %130 = vmatprep.subr.mxu0 0.0
    %131 = vmatpush2.msra.mxu0 0.0
    %132 = vmatprep.subr.mxu0 0.0
    %133 = vmatpush2.msra.mxu0 0.0
    %134 = vmatprep.subr.mxu0 0.0
    %135 = vmatpush2.msra.mxu0 0.0
    %136 = vmatprep.subr.mxu0 0.0
    %137 = vmatpush2.msra.mxu0 0.0
    %138 = vmatprep.subr.mxu0 0.0
    %139 = vmatpush2.msra.mxu0 0.0
    %140 = vmatprep.subr.mxu0 0.0
    %141 = vmatpush2.msra.mxu0 0.0
    %142 = vmatprep.subr.mxu0 0.0
    %143 = vmatpush2.msra.mxu0 0.0
    %144 = vmatprep.subr.mxu0 0.0
    %145 = vmatpush2.msra.mxu0 0.0
    %146 = vmatprep.subr.mxu0 0.0
    %147 = vmatpush2.msra.mxu0 0.0
    %148 = vmatprep.subr.mxu0 0.0
    %149 = vmatpush2.msra.mxu0 0.0
    %150 = vmatprep.subr.mxu0 0.0
    %151 = vmatpush2.msra.mxu0 0.0
    %152 = vmatprep.subr.mxu0 0.0
    %153 = vmatpush2.msra.mxu0 0.0
    %154 = vmatprep.mubr.f32.mxu0 0.0
    %155 = vmatmul.mubr.f32.gmra.mxu0 %v85
    %v156 = vpop.f32.mrf.mxu0
    %v157 = vadd.f32 0.0, %v156
    %v158 = vpop.f32.mrf.mxu0
    %159 = vmatprep.mubr.f32.mxu0 0.0
    %160 = vmatmul.mubr.f32.gmra.mxu0 %v88
    %v161 = vpop.f32.mrf.mxu0
    %v162 = vadd.f32 0.0, %v161
    %v163 = vpop.f32.mrf.mxu0
    %164 = vdwg.mxu0
    %v165 = vld [vmem:[#allocation2] sm:$0x3]
    %v166 = vld [vmem:[#allocation7] sm:$0xff]
    %v167 = vld [vmem:[#allocation7 + $0x8] sm:$0xff]
    %v168 = vld [vmem:[#allocation7 + $0x10] sm:$0xff]
    %v169 = vld [vmem:[#allocation7 + $0x18] sm:$0xff]
    %v170 = vld [vmem:[%s4] sm:$0x1]
    %v172 = vsel %vm83, %v165, 0
    %174 = vmatprep.subr.mxu0 0.0
    %175 = vmatpush1.msra.mxu0 0.0
    %176 = vmatprep.subr.mxu0 0.0
    %177 = vmatpush1.msra.mxu0 0.0
    %178 = vmatprep.subr.mxu0 0.0
    %179 = vmatpush1.msra.mxu0 0.0
    %180 = vmatprep.subr.mxu0 0.0
    %181 = vmatpush1.msra.mxu0 0.0
    %182 = vmatprep.subr.mxu0 0.0
    %183 = vmatpush1.msra.mxu0 0.0
    %184 = vmatprep.subr.mxu0 0.0
    %185 = vmatpush1.msra.mxu0 0.0
    %186 = vmatprep.subr.mxu0 0.0
    %187 = vmatpush1.msra.mxu0 0.0
    %188 = vmatprep.subr.mxu0 0.0
    %189 = vmatpush1.msra.mxu0 0.0
    %190 = vmatprep.subr.mxu0 0.0
    %191 = vmatpush1.msra.mxu0 0.0
    %192 = vmatprep.subr.mxu0 0.0
    %193 = vmatpush1.msra.mxu0 0.0
    %194 = vmatprep.subr.mxu0 0.0
    %195 = vmatpush1.msra.mxu0 0.0
    %196 = vmatprep.subr.mxu0 0.0
    %197 = vmatpush1.msra.mxu0 0.0
    %198 = vmatprep.subr.mxu0 0.0
    %199 = vmatpush1.msra.mxu0 %v169
    %200 = vmatprep.subr.mxu0 0.0
    %201 = vmatpush1.msra.mxu0 %v168
    %202 = vmatprep.subr.mxu0 0.0
    %203 = vmatpush1.msra.mxu0 %v167
    %204 = vmatprep.subr.mxu0 0.0
    %205 = vmatpush1.msra.mxu0 %v166
    %206 = vmatprep.subr.mxu0 0.0
    %207 = vmatpush2.msra.mxu0 0.0
    %208 = vmatprep.subr.mxu0 0.0
    %209 = vmatpush2.msra.mxu0 0.0
    %210 = vmatprep.subr.mxu0 0.0
    %211 = vmatpush2.msra.mxu0 0.0
    %212 = vmatprep.subr.mxu0 0.0
    %213 = vmatpush2.msra.mxu0 0.0
    %214 = vmatprep.subr.mxu0 0.0
    %215 = vmatpush2.msra.mxu0 0.0
    %216 = vmatprep.subr.mxu0 0.0
    %217 = vmatpush2.msra.mxu0 0.0
    %218 = vmatprep.subr.mxu0 0.0
    %219 = vmatpush2.msra.mxu0 0.0
    %220 = vmatprep.subr.mxu0 0.0
    %221 = vmatpush2.msra.mxu0 0.0
    %222 = vmatprep.subr.mxu0 0.0
    %223 = vmatpush2.msra.mxu0 0.0
    %224 = vmatprep.subr.mxu0 0.0
    %225 = vmatpush2.msra.mxu0 0.0
    %226 = vmatprep.subr.mxu0 0.0
    %227 = vmatpush2.msra.mxu0 0.0
    %228 = vmatprep.subr.mxu0 0.0
    %229 = vmatpush2.msra.mxu0 0.0
    %230 = vmatprep.subr.mxu0 0.0
    %231 = vmatpush2.msra.mxu0 0.0
    %232 = vmatprep.subr.mxu0 0.0
    %233 = vmatpush2.msra.mxu0 0.0
    %234 = vmatprep.subr.mxu0 0.0
    %235 = vmatpush2.msra.mxu0 0.0
    %236 = vmatprep.subr.mxu0 0.0
    %237 = vmatpush2.msra.mxu0 0.0
    %238 = vmatprep.mubr.f32.mxu0 0.0
    %239 = vmatmul.mubr.f32.gmra.mxu0 %v172
    %v240 = vpop.f32.mrf.mxu0
    %v241 = vadd.f32 0.0, %v240
    %v242 = vpop.f32.mrf.mxu0
    %243 = vdwg.mxu0
    %v246 = vunpack.c.l.s4 1966171168
    %v247 = vunpack.c.0.s8 %v246
    %v248 = vlaneseq
    %v249 = vshrl.u32 %v248, 7
    %v250 = vsub.s32 %v247, %v249
    %v251 = vrot.slane %v241, %v250
    %v252 = vcombine.high %v251, %v251
    %v254 = vunpack.c.l.s4 1966171168
    %v255 = vunpack.c.0.s8 %v254
    %v256 = vlaneseq
    %v257 = vshrl.u32 %v256, 7
    %v258 = vsub.s32 %v255, %v257
    %v259 = vrot.slane %v251, %v258
    %v261 = vunpack.c.l.s4 1966171168
    %v262 = vunpack.c.0.s8 %v261
    %v263 = vlaneseq
    %v264 = vshrl.u32 %v263, 7
    %v265 = vsub.s32 %v262, %v264
    %v266 = vrot.slane %v252, %v265
    %v267 = vlaneseq
    %v268 = vshrl.u32 %v267, 7
    %v269 = vsub.s32 0, %v268
    %v270 = vrot.slane %v259, %v269
    %v271 = vlaneseq
    %v272 = vshrl.u32 %v271, 7
    %v273 = vsub.s32 0, %v272
    %v274 = vrot.slane %v266, %v273
    %v277 = vadd.f32 %v270, %v157
    %v278 = vadd.f32 %v274, %v162
    %v279 = vtanh.pop %v277
    %v280 = vtanh.pop %v278
    %v282 = vlaneseq
    %v283 = vshrl.u32 %v282, 7
    %v284 = vsub.s32 0, %v283
    %v285 = vrot.slane %v170, %v284
    %v287 = vmul.f32 %v279, %v285
    %v288 = vmul.f32 %v280, %v285
    %v289 = vsel %vm83, %v287, 0.0
    %290 = vadd.xlane.f32.xlu0 %v289
    %v291 = vpop.xlane.xlu0 %290
    %v292 = vsel %vm83, %v288, 0.0
    %293 = vadd.xlane.f32.xlu0 %v292
    %v294 = vpop.xlane.xlu0 %293
    %v297 = vlaneseq
    %v298 = vand.u32 %v297, 127
    %v299 = vlaneseq
    %v300 = vshrl.u32 %v299, 7
    %v301 = vsub.s32 %v298, %v300
    %v302 = vrot.slane %v291, %v301
    %v303 = vlaneseq
    %v304 = vshrl.u32 %v303, 7
    %v305 = vsub.s32 %v298, %v304
    %v306 = vrot.slane %v294, %v305
    %vm307 = vcmask 1041409
    %v308 = vsel %vm307, %v306, %v302
    %vm310 = vcmask 58368
    %v311 = vsel %vm310, %v308, -inf
    %312 = vmax.xlane.f32.xlu0 %v311
    %v313 = vpop.xlane.xlu0 %312
    %v315 = vlaneseq
    %v316 = vshrl.u32 %v315, 7
    %v317 = vsub.s32 0, %v316
    %v318 = vrot.slane %v313, %v317
    %v319 = vlaneseq
    %v320 = vshrl.u32 %v319, 7
    %v321 = vsub.s32 1, %v320
    %v322 = vrot.slane %v313, %v321
    %v325 = vsub.f32 %v291, %v318
    %v326 = vsub.f32 %v294, %v322
    %v327 = vmul.f32 %v325, 1.442695
    %v328 = vpow.pop %v327
    %v329 = vmul.f32 %v326, 1.442695
    %v330 = vpow.pop %v329
    %333 = vset.pattern.permute.xlu0 0
    %334 = vperm.xlu0 %333, %v328
    %v335 = vpop.permute.xlu0 %334
    %336 = vset.pattern.permute.xlu0 0
    %337 = vperm.xlu0 %336, %v330
    %v338 = vpop.permute.xlu0 %337
    %v339 = vlaneseq
    %v340 = vshrl.u32 %v339, 7
    %v341 = vsub.s32 %v298, %v340
    %v342 = vrot.slane %v335, %v341
    %v343 = vlaneseq
    %v344 = vshrl.u32 %v343, 7
    %v345 = vsub.s32 %v298, %v344
    %v346 = vrot.slane %v338, %v345
    %v347 = vsel %vm307, %v346, %v342
    %v349 = vsel %vm310, %v347, 0.0
    %350 = vadd.xlane.f32.xlu0 %v349
    %v351 = vpop.xlane.xlu0 %350
    %v353 = vlaneseq
    %v354 = vshrl.u32 %v353, 7
    %v355 = vsub.s32 0, %v354
    %v356 = vrot.slane %v351, %v355
    %v357 = vlaneseq
    %v358 = vshrl.u32 %v357, 7
    %v359 = vsub.s32 1, %v358
    %v360 = vrot.slane %v351, %v359
    %v363 = vrcp.pop %v356
    %v364 = vmul.f32 %v328, %v363
    %v365 = vrcp.pop %v360
    %v366 = vmul.f32 %v330, %v365
    %368 = vset.pattern.permute.xlu0 0
    %369 = vperm.xlu0 %368, %v364
    %v370 = vpop.permute.xlu0 %369
    %v371 = vlaneseq
    %v372 = vshrl.u32 %v371, 7
    %v373 = vsub.s32 %v298, %v372
    %v374 = vrot.slane %v370, %v373
    %vm375 = vcmask 64512
    %v376 = vsel %vm375, %v374, 0
    %378 = vmatprep.subr.mxu0 0.0
    %379 = vmatpush1.msra.mxu0 0.0
    %380 = vmatprep.subr.mxu0 0.0
    %381 = vmatpush1.msra.mxu0 0.0
    %382 = vmatprep.subr.mxu0 0.0
    %383 = vmatpush1.msra.mxu0 0.0
    %384 = vmatprep.subr.mxu0 0.0
    %385 = vmatpush1.msra.mxu0 0.0
    %386 = vmatprep.subr.mxu0 0.0
    %387 = vmatpush1.msra.mxu0 0.0
    %388 = vmatprep.subr.mxu0 0.0
    %389 = vmatpush1.msra.mxu0 0.0
    %390 = vmatprep.subr.mxu0 0.0
    %391 = vmatpush1.msra.mxu0 0.0
    %392 = vmatprep.subr.mxu0 0.0
    %393 = vmatpush1.msra.mxu0 0.0
    %394 = vmatprep.subr.mxu0 0.0
    %395 = vmatpush1.msra.mxu0 0.0
    %396 = vmatprep.subr.mxu0 0.0
    %397 = vmatpush1.msra.mxu0 0.0
    %398 = vmatprep.subr.mxu0 0.0
    %399 = vmatpush1.msra.mxu0 0.0
    %400 = vmatprep.subr.mxu0 0.0
    %401 = vmatpush1.msra.mxu0 0.0
    %402 = vmatprep.subr.mxu0 0.0
    %403 = vmatpush1.msra.mxu0 0.0
    %404 = vmatprep.subr.mxu0 0.0
    %405 = vmatpush1.msra.mxu0 0.0
    %406 = vmatprep.subr.mxu0 0.0
    %407 = vmatpush1.msra.mxu0 0.0
    %408 = vmatprep.subr.mxu0 0.0
    %409 = vmatpush1.msra.mxu0 %v77
    %410 = vmatprep.subr.mxu0 0.0
    %411 = vmatpush2.msra.mxu0 0.0
    %412 = vmatprep.subr.mxu0 0.0
    %413 = vmatpush2.msra.mxu0 0.0
    %414 = vmatprep.subr.mxu0 0.0
    %415 = vmatpush2.msra.mxu0 0.0
    %416 = vmatprep.subr.mxu0 0.0
    %417 = vmatpush2.msra.mxu0 0.0
    %418 = vmatprep.subr.mxu0 0.0
    %419 = vmatpush2.msra.mxu0 0.0
    %420 = vmatprep.subr.mxu0 0.0
    %421 = vmatpush2.msra.mxu0 0.0
    %422 = vmatprep.subr.mxu0 0.0
    %423 = vmatpush2.msra.mxu0 0.0
    %424 = vmatprep.subr.mxu0 0.0
    %425 = vmatpush2.msra.mxu0 0.0
    %426 = vmatprep.subr.mxu0 0.0
    %427 = vmatpush2.msra.mxu0 0.0
    %428 = vmatprep.subr.mxu0 0.0
    %429 = vmatpush2.msra.mxu0 0.0
    %430 = vmatprep.subr.mxu0 0.0
    %431 = vmatpush2.msra.mxu0 0.0
    %432 = vmatprep.subr.mxu0 0.0
    %433 = vmatpush2.msra.mxu0 0.0
    %434 = vmatprep.subr.mxu0 0.0
    %435 = vmatpush2.msra.mxu0 0.0
    %436 = vmatprep.subr.mxu0 0.0
    %437 = vmatpush2.msra.mxu0 0.0
    %438 = vmatprep.subr.mxu0 0.0
    %439 = vmatpush2.msra.mxu0 0.0
    %440 = vmatprep.subr.mxu0 0.0
    %441 = vmatpush2.msra.mxu0 0.0
    %442 = vmatprep.mubr.f32.mxu0 0.0
    %443 = vmatmul.mubr.f32.gmra.mxu0 %v376
    %v444 = vpop.f32.mrf.mxu0
    %v445 = vadd.f32 0.0, %v444
    %v446 = vpop.f32.mrf.mxu0
    %447 = vdwg.mxu0
    %449 = vset.pattern.permute.xlu0 0
    %450 = vperm.xlu0 %449, %v366
    %v451 = vpop.permute.xlu0 %450
    %v452 = vlaneseq
    %v453 = vshrl.u32 %v452, 7
    %v454 = vsub.s32 %v298, %v453
    %v455 = vrot.slane %v451, %v454
    %v456 = vsel %vm375, %v455, 0
    %458 = vmatprep.subr.mxu0 0.0
    %459 = vmatpush1.msra.mxu0 0.0
    %460 = vmatprep.subr.mxu0 0.0
    %461 = vmatpush1.msra.mxu0 0.0
    %462 = vmatprep.subr.mxu0 0.0
    %463 = vmatpush1.msra.mxu0 0.0
    %464 = vmatprep.subr.mxu0 0.0
    %465 = vmatpush1.msra.mxu0 0.0
    %466 = vmatprep.subr.mxu0 0.0
    %467 = vmatpush1.msra.mxu0 0.0
    %468 = vmatprep.subr.mxu0 0.0
    %469 = vmatpush1.msra.mxu0 0.0
    %470 = vmatprep.subr.mxu0 0.0
    %471 = vmatpush1.msra.mxu0 0.0
    %472 = vmatprep.subr.mxu0 0.0
    %473 = vmatpush1.msra.mxu0 0.0
    %474 = vmatprep.subr.mxu0 0.0
    %475 = vmatpush1.msra.mxu0 0.0
    %476 = vmatprep.subr.mxu0 0.0
    %477 = vmatpush1.msra.mxu0 0.0
    %478 = vmatprep.subr.mxu0 0.0
    %479 = vmatpush1.msra.mxu0 0.0
    %480 = vmatprep.subr.mxu0 0.0
    %481 = vmatpush1.msra.mxu0 0.0
    %482 = vmatprep.subr.mxu0 0.0
    %483 = vmatpush1.msra.mxu0 0.0
    %484 = vmatprep.subr.mxu0 0.0
    %485 = vmatpush1.msra.mxu0 0.0
    %486 = vmatprep.subr.mxu0 0.0
    %487 = vmatpush1.msra.mxu0 0.0
    %488 = vmatprep.subr.mxu0 0.0
    %489 = vmatpush1.msra.mxu0 %v78
    %490 = vmatprep.subr.mxu0 0.0
    %491 = vmatpush2.msra.mxu0 0.0
    %492 = vmatprep.subr.mxu0 0.0
    %493 = vmatpush2.msra.mxu0 0.0
    %494 = vmatprep.subr.mxu0 0.0
    %495 = vmatpush2.msra.mxu0 0.0
    %496 = vmatprep.subr.mxu0 0.0
    %497 = vmatpush2.msra.mxu0 0.0
    %498 = vmatprep.subr.mxu0 0.0
    %499 = vmatpush2.msra.mxu0 0.0
    %500 = vmatprep.subr.mxu0 0.0
    %501 = vmatpush2.msra.mxu0 0.0
    %502 = vmatprep.subr.mxu0 0.0
    %503 = vmatpush2.msra.mxu0 0.0
    %504 = vmatprep.subr.mxu0 0.0
    %505 = vmatpush2.msra.mxu0 0.0
    %506 = vmatprep.subr.mxu0 0.0
    %507 = vmatpush2.msra.mxu0 0.0
    %508 = vmatprep.subr.mxu0 0.0
    %509 = vmatpush2.msra.mxu0 0.0
    %510 = vmatprep.subr.mxu0 0.0
    %511 = vmatpush2.msra.mxu0 0.0
    %512 = vmatprep.subr.mxu0 0.0
    %513 = vmatpush2.msra.mxu0 0.0
    %514 = vmatprep.subr.mxu0 0.0
    %515 = vmatpush2.msra.mxu0 0.0
    %516 = vmatprep.subr.mxu0 0.0
    %517 = vmatpush2.msra.mxu0 0.0
    %518 = vmatprep.subr.mxu0 0.0
    %519 = vmatpush2.msra.mxu0 0.0
    %520 = vmatprep.subr.mxu0 0.0
    %521 = vmatpush2.msra.mxu0 0.0
    %522 = vmatprep.mubr.f32.mxu0 0.0
    %523 = vmatmul.mubr.f32.gmra.mxu0 %v456
    %v524 = vpop.f32.mrf.mxu0
    %v525 = vadd.f32 0.0, %v524
    %v526 = vpop.f32.mrf.mxu0
    %527 = vdwg.mxu0
    %vm528 = vcmask 253952
    %529 = vst.msk [vmem:[#allocation10] sm:$0x1] %vm528, %v445
    %530 = vst.msk [vmem:[#allocation10 + $0x1] sm:$0x1] %vm528, %v525
    %v531 = vsel %vm307, %v455, %v374
    %533 = vst.msk [vmem:[#allocation11] sm:$0x3] %vm310, %v531
    // Predicated region
    $region38: #{tpu_custom_call.1} parent=1 // pred_check
      _
    $region39: #{tpu_custom_call.1} parent=1 // pred_check_branch
      %535 = sbr.rel (0) target = $region41
    $region40: #{tpu_custom_call.1} parent=1 // pred_region
      %s537 = ssub.s32 32, 32
      %538 = vsyncadd [#allocation4], %s537
      %s539 = sshll.u32 [#allocation10], 4
      %s540 = int_to_ptr.vmem [resolvable:$true] %s539
      %545 = dma.vmem_to_hbm [thread:$0]  %s540, 32, %s5, [#allocation4], 16, 16, 1
    $region41: #{tpu_custom_call.1} parent=1 // pred_fallthru
      _
    // Predicated region
    $region42: #{tpu_custom_call.1} parent=1 // pred_check
      _
    $region43: #{tpu_custom_call.1} parent=1 // pred_check_branch
      %547 = sbr.rel (0) target = $region45
    $region44: #{tpu_custom_call.1} parent=1 // pred_region
      %s549 = ssub.s32 32, 32
      %550 = vsyncadd [#allocation12], %s549
      %s552 = sshll.u32 [#allocation11], 4
      %s553 = int_to_ptr.vmem [resolvable:$true] %s552
      %555 = dma.vmem_to_hbm [thread:$0]  %s553, 32, %s6, [#allocation12]
    $region45: #{tpu_custom_call.1} parent=1 // pred_fallthru
      _
    // Predicated region
    $region46: #{tpu_custom_call.1} parent=1 // pred_check
      _
    $region47: #{tpu_custom_call.1} parent=1 // pred_check_branch
      %557 = sbr.rel (0) target = $region49
    $region48: #{tpu_custom_call.1} parent=1 // pred_region
      %558 = dma.done [#allocation4], 32
    $region49: #{tpu_custom_call.1} parent=1 // pred_fallthru
      _
    // Predicated region
    $region50: #{tpu_custom_call.1} parent=1 // pred_check
      _
    $region51: #{tpu_custom_call.1} parent=1 // pred_check_branch
      %560 = sbr.rel (0) target = $region53
    $region52: #{tpu_custom_call.1} parent=1 // pred_region
      %561 = dma.done [#allocation12], 32
    $region53: #{tpu_custom_call.1} parent=1 // pred_fallthru
      _
    %562 = vsyncpa [#allocation3], 1
    %563 = vsyncpa [#allocation6], 1
    %564 = vsyncpa [#allocation9], 1
    %565 = vsyncpa [#allocation4], 1
    %566 = vsyncpa [#allocation12], 1

</llo_original>
